<compile_context>
chip_gen: v6e
topology: v6e:2x2x1
jax: 0.10.0
libtpu: 0.0.40
codegen_flags: <defaults>
</compile_context>

<pallas_src>
import math

import jax
import jax.numpy as jnp
from jax.experimental import pallas as pl
from jax.experimental.pallas import tpu as pltpu


_LANE = 128                                   # TPU vreg lane width
_DEFAULT_MIN_PALLAS_BYTES = 1 * 1024 * 1024   # below this, jnp.transpose wins
_VMEM_CAP_BYTES = 48 * 1024 * 1024            # stay under v7x's 64 MiB VMEM
_VMEM_FLOOR_BYTES = 32 * 1024 * 1024
_SCRATCH_HEADROOM = 2 * 1024 * 1024           # compiler scratch headroom
_MIN_STRIDED_CHUNK_BYTES = 512                # strided-DMA read-chunk floor


def _default_tile_bytes():
    """Chip-aware per-slab tile target.

    Bigger tiles amortize the ~0.35 us fixed per-grid-step cost; at v7x's
    3.2 TB/s HBM a 2 MiB step is ~1.3 us (20-25% overhead), so we want >= 4 MiB.
    128 MiB-VMEM parts (v5e / v6e) can afford 8 MiB slabs for free.
    """
    try:
        vmem = pltpu.get_tpu_info().vmem_capacity_bytes
    except Exception:
        vmem = None
    if vmem is not None and vmem >= 96 * 1024 * 1024:
        return 8 * 1024 * 1024
    return 4 * 1024 * 1024


def _rotation_fold(shape, new_order):
    """If new_order == (0, k, ..., n-1, 1, ..., k-1), return (k, L, R).

    Such a permutation (batch leading, trailing axes rotated) is exactly a
    [B, L, R] -> [B, R, L] transpose of the folded view, with
    L = prod(shape[1:k]) and R = prod(shape[k:]).  Returns None otherwise.
    """
    n = len(shape)
    if n < 3 or new_order[0] != 0:
        return None
    for k in range(2, n):
        cand = (0,) + tuple(range(k, n)) + tuple(range(1, k))
        if tuple(new_order) == cand:
            return k, math.prod(shape[1:k]), math.prod(shape[k:])
    return None


def _tile_len(dim, align, max_len):
    """Largest t with t % align == 0, dim % t == 0 and t <= max_len.

    Falls back to the full dim (always a legal block extent) when the dim is
    not `align`-divisible or already fits in `max_len`.  Callers must check
    that the resulting tile still fits the VMEM budget.
    """
    if dim <= max_len or dim % align != 0:
        return dim
    best = None
    t = align
    while t <= max_len:
        if dim % t == 0:
            best = t
        t += align
    return best if best is not None else dim


def _largest_divisor_le(n, cap):
    cap = max(1, min(n, cap))
    for d in range(cap, 0, -1):
        if n % d == 0:
            return d
    return 1


def _input_spec(block_shape, index_map, extra_buffering):
    """Input BlockSpec; requests 3-deep buffering for strided reads when the
    current Pallas version supports pipeline_mode (extra buffer hides the
    longer completion latency of strided input DMAs)."""
    if extra_buffering and hasattr(pl, "Buffered"):
        try:
            return pl.BlockSpec(block_shape, index_map,
                                pipeline_mode=pl.Buffered(3))
        except TypeError:  # older signature without pipeline_mode
            pass
    return pl.BlockSpec(block_shape, index_map)


def _transpose2d_kernel(x_ref, o_ref):
    # Batch dim squeezed out of the block: pure 2-D refs lower straight to the
    # XLU transpose with no intermediate VMEM relayout.
    # x_ref: (l_tile, r_tile) -> o_ref: (r_tile, l_tile)
    o_ref[...] = jnp.swapaxes(x_ref[...], 0, 1)


def _transpose3d_kernel(x_ref, o_ref):
    # Batch-folded path: x_ref (b_tile, L, R) -> o_ref (b_tile, R, L)
    o_ref[...] = jnp.swapaxes(x_ref[...], 1, 2)


def _permute_one_pallas(x, k, target_tile_bytes):
    """Lane-dense Pallas relayout for a batch-leading rotation permutation.

    Returns None when no legal tiling fits the VMEM budget (caller falls back
    to jnp.transpose) — this guards the full-dim fallback of _tile_len, which
    on v7x (64 MiB VMEM) could otherwise blow past the limit.
    """
    shape = tuple(x.shape)
    B = shape[0]
    L = math.prod(shape[1:k])   # stays contiguous, becomes the output lane dim
    R = math.prod(shape[k:])    # moved to the front, input lane dim
    itemsize = jnp.dtype(x.dtype).itemsize
    target_elems = max(target_tile_bytes // itemsize, _LANE * _LANE)

    x3 = x.reshape(B, L, R)     # contiguous fold (metadata-only)
    out_shape_final = (B,) + tuple(shape[k:]) + tuple(shape[1:k])
    nbytes = B * L * R * itemsize
    # Pure relayout: tell XLA this custom call is mem-bound so it can schedule
    # neighboring backbone/neck ops around it.
    cost = pl.CostEstimate(flops=0, transcendentals=0,
                           bytes_accessed=2 * nbytes)
    per_image = L * R

    # ---- Case A: whole images are small -> fold several batch elements into
    # one grid step so each step moves ~target_tile_bytes.
    if per_image <= target_elems and B > 1:
        b_tile = _largest_divisor_le(B, target_elems // per_image)
        if b_tile > 1:
            tile_bytes = b_tile * per_image * itemsize
            need = 4 * tile_bytes + _SCRATCH_HEADROOM   # 2x in + 2x out bufs
            if need <= _VMEM_CAP_BYTES:
                vmem_limit = int(min(max(need, _VMEM_FLOOR_BYTES),
                                     _VMEM_CAP_BYTES))
                out3 = pl.pallas_call(
                    _transpose3d_kernel,
                    out_shape=jax.ShapeDtypeStruct((B, R, L), x.dtype),
                    grid=(B // b_tile,),
                    in_specs=[pl.BlockSpec((b_tile, L, R),
                                           lambda b: (b, 0, 0))],
                    out_specs=pl.BlockSpec((b_tile, R, L),
                                           lambda b: (b, 0, 0)),
                    compiler_params=pltpu.CompilerParams(
                        dimension_semantics=("parallel",),
                        vmem_limit_bytes=vmem_limit,
                    ),
                    cost_estimate=cost,
                )(x3)
                return out3.reshape(out_shape_final)
        # b_tile == 1 (or slab too big): fall through to per-image tiling.

    # ---- Case B: per-image tiling; batch dim squeezed out of the block so
    # the kernel body sees clean 2-D refs.
    # Keep strided input reads >= _MIN_STRIDED_CHUNK_BYTES per row so bf16 /
    # int8 features don't become descriptor-bound.
    min_chunk = max(_LANE, _MIN_STRIDED_CHUNK_BYTES // itemsize)
    r_tile = _tile_len(R, min_chunk, max(min_chunk, target_elems // max(L, 1)))
    l_tile = L
    if L * r_tile > target_elems:
        l_tile = _tile_len(L, _LANE, max(_LANE, target_elems // r_tile))
    # NOTE: when L is not a multiple of 128 (e.g. 14x14=196 tokens) the output
    # stores are masked vst.msk and the lane-dense win shrinks; jnp.transpose
    # remains a fine fallback for such shapes via min_pallas_bytes.

    tile_bytes = l_tile * r_tile * itemsize
    extra_buffering = r_tile < R          # strided input reads
    in_bufs = 3 if extra_buffering else 2
    need = (in_bufs + 2) * tile_bytes + _SCRATCH_HEADROOM
    if need > _VMEM_CAP_BYTES and extra_buffering:
        extra_buffering = False
        need = 4 * tile_bytes + _SCRATCH_HEADROOM
    if need > _VMEM_CAP_BYTES:
        return None                       # no legal tiling fits; let XLA do it

    vmem_limit = int(min(max(need, _VMEM_FLOOR_BYTES), _VMEM_CAP_BYTES))
    grid = (B, R // r_tile, L // l_tile)

    out3 = pl.pallas_call(
        _transpose2d_kernel,
        out_shape=jax.ShapeDtypeStruct((B, R, L), x.dtype),
        grid=grid,
        in_specs=[_input_spec((None, l_tile, r_tile),
                              lambda b, rc, lc: (b, lc, rc),
                              extra_buffering)],
        out_specs=pl.BlockSpec((None, r_tile, l_tile),
                               lambda b, rc, lc: (b, rc, lc)),
        compiler_params=pltpu.CompilerParams(
            # Pure relayout: every output block is written exactly once.
            # TODO(synk): on v7x, marking the largest even axis CORE_PARALLEL
            # (or an explicit core_map split) would shard across both
            # TensorCores; kept portable here since plain "parallel" is safe
            # on every generation.
            dimension_semantics=("parallel", "parallel", "parallel"),
            vmem_limit_bytes=vmem_limit,
        ),
        cost_estimate=cost,
    )(x3)

    return out3.reshape(out_shape_final)


def permute_dims(x, new_order, *, min_pallas_bytes=_DEFAULT_MIN_PALLAS_BYTES,
                 target_tile_bytes=None):
    """JAX equivalent of `x.permute(*new_order).contiguous()`."""
    shape = tuple(x.shape)
    rank = len(shape)
    new_order = tuple(int(i) % rank for i in new_order) if rank else ()
    assert len(new_order) == rank, "new_order must match tensor rank"

    if new_order == tuple(range(rank)):
        return x  # identity permute

    fold = _rotation_fold(shape, new_order)
    nbytes = math.prod(shape) * jnp.dtype(x.dtype).itemsize
    if fold is None or nbytes < min_pallas_bytes or min(shape) == 0:
        # Small tensors: per-call / per-step overhead dominates.
        # TODO(synk): general (non batch-leading-rotation) permutations have
        # no single lane-dense 2-D fold; XLA's native transpose handles them.
        return jnp.transpose(x, new_order)

    if target_tile_bytes is None:
        target_tile_bytes = _default_tile_bytes()

    k, _, _ = fold
    out = _permute_one_pallas(x, k, target_tile_bytes)
    if out is None:
        return jnp.transpose(x, new_order)
    return out


class PermuteDims:
    """JAX/Pallas port of terratorch.models.necks.PermuteDims."""

    def __init__(self, channel_list, new_order, *,
                 min_pallas_bytes=_DEFAULT_MIN_PALLAS_BYTES,
                 target_tile_bytes=None):
        self.channel_list = list(channel_list)
        self.new_order = tuple(int(i) for i in new_order)
        self.min_pallas_bytes = min_pallas_bytes
        self.target_tile_bytes = target_tile_bytes

    def process_channel_list(self, channel_list):
        return list(channel_list)

    def __call__(self, features):
        return [permute_dims(f, self.new_order,
                             min_pallas_bytes=self.min_pallas_bytes,
                             target_tile_bytes=self.target_tile_bytes)
                for f in features]


if __name__ == "__main__":
    key = jax.random.PRNGKey(0)
    k1, k2, k3, k4 = jax.random.split(key, 4)

    # Small pyramid of NHWC features (ViT-style backbone outputs).
    x1 = jax.random.normal(k1, (2, 16, 16, 32), dtype=jnp.float32)
    x2 = jax.random.normal(k2, (2, 8, 8, 64), dtype=jnp.float32)
    x3 = jax.random.normal(k3, (2, 16, 16, 128), dtype=jnp.float32)
    x4 = jax.random.normal(k4, (2, 8, 8, 256), dtype=jnp.float32)
    features = [x1, x2, x3]

    new_order = (0, 3, 1, 2)  # NHWC -> NCHW

    # 1) Force the Pallas path (batch-folded case A at these small shapes).
    neck = PermuteDims(channel_list=[32, 64, 128], new_order=new_order,
                       min_pallas_bytes=0)
    outs = [jax.block_until_ready(o) for o in neck(features)]
    for x, o in zip(features, outs):
        ref = jnp.transpose(x, new_order)
        assert o.shape == ref.shape, (o.shape, ref.shape)
        assert o.dtype == ref.dtype
        assert jnp.array_equal(o, ref), "Pallas permute mismatch vs reference"

    # 2) Default neck: tiny features take the jnp.transpose fallback.
    neck_default = PermuteDims(channel_list=[32, 64, 128], new_order=new_order)
    for x, o in zip(features, neck_default(features)):
        assert jnp.array_equal(jax.block_until_ready(o),
                               jnp.transpose(x, new_order))

    # 3) Exercise the per-image tiled path (squeezed 2-D kernel) by forcing a
    #    tiny tile target.
    o_tiled = permute_dims(x3, new_order, min_pallas_bytes=0,
                           target_tile_bytes=64 * 1024)
    jax.block_until_ready(o_tiled)
    assert jnp.array_equal(o_tiled, jnp.transpose(x3, new_order))

    # 4) Exercise the strided-read path (r_tile < R, extra input buffering).
    o_strided = permute_dims(x4, new_order, min_pallas_bytes=0,
                             target_tile_bytes=32 * 1024)
    jax.block_until_ready(o_strided)
    assert jnp.array_equal(o_strided, jnp.transpose(x4, new_order))

    # 5) Reverse rotation NCHW -> NHWC = (0, 2, 3, 1) and round-trip.
    y = jnp.transpose(x3, new_order)                       # (2, 128, 16, 16)
    back = permute_dims(y, (0, 2, 3, 1), min_pallas_bytes=0)
    jax.block_until_ready(back)
    assert back.shape == x3.shape
    assert jnp.array_equal(back, x3), "round-trip permute mismatch"

    print("KERNEL_OK")
</pallas_src>

<mosaic_0001>
module attributes {stable_mosaic.version = 11 : i64} {
  func.func @_transpose3d_kernel(%arg0: i32, %arg1: memref<2x256x32xf32, #tpu.memory_space<vmem>>, %arg2: memref<2x32x256xf32, #tpu.memory_space<vmem>>) attributes {dimension_semantics = [#tpu.dimension_semantics<parallel>], iteration_bounds = array<i64: 1>, scalar_prefetch = 0 : i64, scratch_operands = 0 : i64, tpu.core_type = #tpu.core_type<tc>, window_params = [{transform_indices = @transform_0, window_bounds = array<i64: 2, 256, 32>}, {transform_indices = @transform_1, window_bounds = array<i64: 2, 32, 256>}]} {
    %c0 = arith.constant 0 : index
    %c0_0 = arith.constant 0 : index
    %c0_1 = arith.constant 0 : index
    %0 = vector.load %arg1[%c0, %c0_0, %c0_1] : memref<2x256x32xf32, #tpu.memory_space<vmem>>, vector<2x256x32xf32>
    %1 = tpu.transpose %0, [0, 2, 1] : vector<2x256x32xf32> -> vector<2x32x256xf32>
    %c0_2 = arith.constant 0 : index
    %c0_3 = arith.constant 0 : index
    %c0_4 = arith.constant 0 : index
    %2 = vector.load %arg2[%c0_2, %c0_3, %c0_4] : memref<2x32x256xf32, #tpu.memory_space<vmem>>, vector<2x32x256xf32>
    tpu.vector_store %arg2[%c0_2, %c0_3, %c0_4], %1 {strides = array<i32>} : memref<2x32x256xf32, #tpu.memory_space<vmem>>, vector<2x32x256xf32>,
    return
  }
  func.func @transform_0(%arg0: i32) -> (i32, i32, i32) {
    %c0_i32 = arith.constant 0 : i32
    %c0_i32_0 = arith.constant 0 : i32
    %c0_i32_1 = arith.constant 0 : i32
    return %arg0, %c0_i32, %c0_i32_0 : i32, i32, i32
  }
  func.func @transform_1(%arg0: i32) -> (i32, i32, i32) {
    %c0_i32 = arith.constant 0 : i32
    %c0_i32_0 = arith.constant 0 : i32
    %c0_i32_1 = arith.constant 0 : i32
    return %arg0, %c0_i32, %c0_i32_0 : i32, i32, i32
  }
}

</mosaic_0001>

<llo_original>
// kernel: tpu_custom_call.1
$region0: #{tpu_custom_call.1}
  #allocation0 [shape = 'u32[]', space=smem, size = 0x4, offset = 0x4, fixed_abs, tag = 'smem constant byte address 0x4 - core index']
  #allocation1 [shape = 'u32[144,128]{1,0:T(1,128)}', space=vmem, size = 0x12000, scoped, tag = 'internal scratch']
  %s0 = inlined_call_operand.vmem [shape: f32[2,256,32], index: 0, kind: input, shape index: {}]
  %s1 = inlined_call_operand.hbm [shape: f32[2,32,256], index: 1, kind: output, shape index: {}]
  %s2 = sld [smem:[#allocation0]]
  $region14: #{tpu_custom_call.1} parent=0
    _
  %s4 = ssub.s32 1, %s2
  %s5 = scalar_select 0, %s4, %s2
  $region1: #{tpu_custom_call.1} parent=0
    #allocation2 [shape = 'u8[65536]{0}', space=vmem, size = 0x10000, scoped, tag = 'output window, operand 0, single buffered']
    #allocation3 [shape = 's32[1]{0}', space=sflag, size = 0x4, scoped, tag = 'scoped memory for tpu_custom_call.1']
    %6 = vsyncpa [#allocation3], 0
    // Predicated region
    $region2: #{tpu_custom_call.1} parent=1 // pred_check
      _
    $region3: #{tpu_custom_call.1} parent=1 // pred_check_branch
      %8 = sbr.rel (0) target = $region5
    $region4: #{tpu_custom_call.1} parent=1 // pred_region
      _
    $region5: #{tpu_custom_call.1} parent=1 // pred_fallthru
      _
    %v9 = vld [vmem:[%s0] sm:$0xff]
    %v10 = vld [vmem:[%s0 + $0x8] sm:$0xff]
    %v11 = vld [vmem:[%s0 + $0x10] sm:$0xff]
    %v12 = vld [vmem:[%s0 + $0x18] sm:$0xff]
    %v13 = vld [vmem:[%s0 + $0x20] sm:$0xff]
    %v14 = vld [vmem:[%s0 + $0x28] sm:$0xff]
    %v15 = vld [vmem:[%s0 + $0x30] sm:$0xff]
    %v16 = vld [vmem:[%s0 + $0x38] sm:$0xff]
    %v17 = vld [vmem:[%s0 + $0x40] sm:$0xff]
    %v18 = vld [vmem:[%s0 + $0x48] sm:$0xff]
    %v19 = vld [vmem:[%s0 + $0x50] sm:$0xff]
    %v20 = vld [vmem:[%s0 + $0x58] sm:$0xff]
    %v21 = vld [vmem:[%s0 + $0x60] sm:$0xff]
    %v22 = vld [vmem:[%s0 + $0x68] sm:$0xff]
    %v23 = vld [vmem:[%s0 + $0x70] sm:$0xff]
    %v24 = vld [vmem:[%s0 + $0x78] sm:$0xff]
    %v25 = vld [vmem:[%s0 + $0x80] sm:$0xff]
    %v26 = vld [vmem:[%s0 + $0x88] sm:$0xff]
    %v27 = vld [vmem:[%s0 + $0x90] sm:$0xff]
    %v28 = vld [vmem:[%s0 + $0x98] sm:$0xff]
    %v29 = vld [vmem:[%s0 + $0xa0] sm:$0xff]
    %v30 = vld [vmem:[%s0 + $0xa8] sm:$0xff]
    %v31 = vld [vmem:[%s0 + $0xb0] sm:$0xff]
    %v32 = vld [vmem:[%s0 + $0xb8] sm:$0xff]
    %v33 = vld [vmem:[%s0 + $0xc0] sm:$0xff]
    %v34 = vld [vmem:[%s0 + $0xc8] sm:$0xff]
    %v35 = vld [vmem:[%s0 + $0xd0] sm:$0xff]
    %v36 = vld [vmem:[%s0 + $0xd8] sm:$0xff]
    %v37 = vld [vmem:[%s0 + $0xe0] sm:$0xff]
    %v38 = vld [vmem:[%s0 + $0xe8] sm:$0xff]
    %v39 = vld [vmem:[%s0 + $0xf0] sm:$0xff]
    %v40 = vld [vmem:[%s0 + $0xf8] sm:$0xff]
    %v41 = vld [vmem:[%s0 + $0x100] sm:$0xff]
    %v42 = vld [vmem:[%s0 + $0x108] sm:$0xff]
    %v43 = vld [vmem:[%s0 + $0x110] sm:$0xff]
    %v44 = vld [vmem:[%s0 + $0x118] sm:$0xff]
    %v45 = vld [vmem:[%s0 + $0x120] sm:$0xff]
    %v46 = vld [vmem:[%s0 + $0x128] sm:$0xff]
    %v47 = vld [vmem:[%s0 + $0x130] sm:$0xff]
    %v48 = vld [vmem:[%s0 + $0x138] sm:$0xff]
    %v49 = vld [vmem:[%s0 + $0x140] sm:$0xff]
    %v50 = vld [vmem:[%s0 + $0x148] sm:$0xff]
    %v51 = vld [vmem:[%s0 + $0x150] sm:$0xff]
    %v52 = vld [vmem:[%s0 + $0x158] sm:$0xff]
    %v53 = vld [vmem:[%s0 + $0x160] sm:$0xff]
    %v54 = vld [vmem:[%s0 + $0x168] sm:$0xff]
    %v55 = vld [vmem:[%s0 + $0x170] sm:$0xff]
    %v56 = vld [vmem:[%s0 + $0x178] sm:$0xff]
    %v57 = vld [vmem:[%s0 + $0x180] sm:$0xff]
    %v58 = vld [vmem:[%s0 + $0x188] sm:$0xff]
    %v59 = vld [vmem:[%s0 + $0x190] sm:$0xff]
    %v60 = vld [vmem:[%s0 + $0x198] sm:$0xff]
    %v61 = vld [vmem:[%s0 + $0x1a0] sm:$0xff]
    %v62 = vld [vmem:[%s0 + $0x1a8] sm:$0xff]
    %v63 = vld [vmem:[%s0 + $0x1b0] sm:$0xff]
    %v64 = vld [vmem:[%s0 + $0x1b8] sm:$0xff]
    %v65 = vld [vmem:[%s0 + $0x1c0] sm:$0xff]
    %v66 = vld [vmem:[%s0 + $0x1c8] sm:$0xff]
    %v67 = vld [vmem:[%s0 + $0x1d0] sm:$0xff]
    %v68 = vld [vmem:[%s0 + $0x1d8] sm:$0xff]
    %v69 = vld [vmem:[%s0 + $0x1e0] sm:$0xff]
    %v70 = vld [vmem:[%s0 + $0x1e8] sm:$0xff]
    %v71 = vld [vmem:[%s0 + $0x1f0] sm:$0xff]
    %v72 = vld [vmem:[%s0 + $0x1f8] sm:$0xff]
    %73 = vxpose.xlu0.b32.start [1/16] %v9, 128
    %74 = vxpose.xlu0.b32.cont [2/16] %v10, 128
    %75 = vxpose.xlu0.b32.cont [3/16] %v11, 128
    %76 = vxpose.xlu0.b32.cont [4/16] %v12, 128
    %77 = vxpose.xlu0.b32.cont [5/16] %v13, 128
    %78 = vxpose.xlu0.b32.cont [6/16] %v14, 128
    %79 = vxpose.xlu0.b32.cont [7/16] %v15, 128
    %80 = vxpose.xlu0.b32.cont [8/16] %v16, 128
    %81 = vxpose.xlu0.b32.cont [9/16] %v17, 128
    %82 = vxpose.xlu0.b32.cont [10/16] %v18, 128
    %83 = vxpose.xlu0.b32.cont [11/16] %v19, 128
    %84 = vxpose.xlu0.b32.cont [12/16] %v20, 128
    %85 = vxpose.xlu0.b32.cont [13/16] %v21, 128
    %86 = vxpose.xlu0.b32.cont [14/16] %v22, 128
    %87 = vxpose.xlu0.b32.cont [15/16] %v23, 128
    %88 = vxpose.xlu0.b32.end [16/16] %v24, 128
    %v89 = vpop.trf.xlu0
    %v90 = vpop.trf.xlu0
    %v91 = vpop.trf.xlu0
    %v92 = vpop.trf.xlu0
    %v93 = vpop.trf.xlu0
    %v94 = vpop.trf.xlu0
    %v95 = vpop.trf.xlu0
    %v96 = vpop.trf.xlu0
    %v97 = vpop.trf.xlu0
    %v98 = vpop.trf.xlu0
    %v99 = vpop.trf.xlu0
    %v100 = vpop.trf.xlu0
    %v101 = vpop.trf.xlu0
    %v102 = vpop.trf.xlu0
    %v103 = vpop.trf.xlu0
    %v104 = vpop.trf.xlu0
    %105 = vxpose.xlu0.b32.start [1/16] %v25, 128
    %106 = vxpose.xlu0.b32.cont [2/16] %v26, 128
    %107 = vxpose.xlu0.b32.cont [3/16] %v27, 128
    %108 = vxpose.xlu0.b32.cont [4/16] %v28, 128
    %109 = vxpose.xlu0.b32.cont [5/16] %v29, 128
    %110 = vxpose.xlu0.b32.cont [6/16] %v30, 128
    %111 = vxpose.xlu0.b32.cont [7/16] %v31, 128
    %112 = vxpose.xlu0.b32.cont [8/16] %v32, 128
    %113 = vxpose.xlu0.b32.cont [9/16] %v33, 128
    %114 = vxpose.xlu0.b32.cont [10/16] %v34, 128
    %115 = vxpose.xlu0.b32.cont [11/16] %v35, 128
    %116 = vxpose.xlu0.b32.cont [12/16] %v36, 128
    %117 = vxpose.xlu0.b32.cont [13/16] %v37, 128
    %118 = vxpose.xlu0.b32.cont [14/16] %v38, 128
    %119 = vxpose.xlu0.b32.cont [15/16] %v39, 128
    %120 = vxpose.xlu0.b32.end [16/16] %v40, 128
    %v121 = vpop.trf.xlu0
    %v122 = vpop.trf.xlu0
    %v123 = vpop.trf.xlu0
    %v124 = vpop.trf.xlu0
    %v125 = vpop.trf.xlu0
    %v126 = vpop.trf.xlu0
    %v127 = vpop.trf.xlu0
    %v128 = vpop.trf.xlu0
    %v129 = vpop.trf.xlu0
    %v130 = vpop.trf.xlu0
    %v131 = vpop.trf.xlu0
    %v132 = vpop.trf.xlu0
    %v133 = vpop.trf.xlu0
    %v134 = vpop.trf.xlu0
    %v135 = vpop.trf.xlu0
    %v136 = vpop.trf.xlu0
    %137 = vxpose.xlu0.b32.start [1/16] %v41, 128
    %138 = vxpose.xlu0.b32.cont [2/16] %v42, 128
    %139 = vxpose.xlu0.b32.cont [3/16] %v43, 128
    %140 = vxpose.xlu0.b32.cont [4/16] %v44, 128
    %141 = vxpose.xlu0.b32.cont [5/16] %v45, 128
    %142 = vxpose.xlu0.b32.cont [6/16] %v46, 128
    %143 = vxpose.xlu0.b32.cont [7/16] %v47, 128
    %144 = vxpose.xlu0.b32.cont [8/16] %v48, 128
    %145 = vxpose.xlu0.b32.cont [9/16] %v49, 128
    %146 = vxpose.xlu0.b32.cont [10/16] %v50, 128
    %147 = vxpose.xlu0.b32.cont [11/16] %v51, 128
    %148 = vxpose.xlu0.b32.cont [12/16] %v52, 128
    %149 = vxpose.xlu0.b32.cont [13/16] %v53, 128
    %150 = vxpose.xlu0.b32.cont [14/16] %v54, 128
    %151 = vxpose.xlu0.b32.cont [15/16] %v55, 128
    %152 = vxpose.xlu0.b32.end [16/16] %v56, 128
    %v153 = vpop.trf.xlu0
    %v154 = vpop.trf.xlu0
    %v155 = vpop.trf.xlu0
    %v156 = vpop.trf.xlu0
    %v157 = vpop.trf.xlu0
    %v158 = vpop.trf.xlu0
    %v159 = vpop.trf.xlu0
    %v160 = vpop.trf.xlu0
    %v161 = vpop.trf.xlu0
    %v162 = vpop.trf.xlu0
    %v163 = vpop.trf.xlu0
    %v164 = vpop.trf.xlu0
    %v165 = vpop.trf.xlu0
    %v166 = vpop.trf.xlu0
    %v167 = vpop.trf.xlu0
    %v168 = vpop.trf.xlu0
    %169 = vxpose.xlu0.b32.start [1/16] %v57, 128
    %170 = vxpose.xlu0.b32.cont [2/16] %v58, 128
    %171 = vxpose.xlu0.b32.cont [3/16] %v59, 128
    %172 = vxpose.xlu0.b32.cont [4/16] %v60, 128
    %173 = vxpose.xlu0.b32.cont [5/16] %v61, 128
    %174 = vxpose.xlu0.b32.cont [6/16] %v62, 128
    %175 = vxpose.xlu0.b32.cont [7/16] %v63, 128
    %176 = vxpose.xlu0.b32.cont [8/16] %v64, 128
    %177 = vxpose.xlu0.b32.cont [9/16] %v65, 128
    %178 = vxpose.xlu0.b32.cont [10/16] %v66, 128
    %179 = vxpose.xlu0.b32.cont [11/16] %v67, 128
    %180 = vxpose.xlu0.b32.cont [12/16] %v68, 128
    %181 = vxpose.xlu0.b32.cont [13/16] %v69, 128
    %182 = vxpose.xlu0.b32.cont [14/16] %v70, 128
    %183 = vxpose.xlu0.b32.cont [15/16] %v71, 128
    %184 = vxpose.xlu0.b32.end [16/16] %v72, 128
    %v185 = vpop.trf.xlu0
    %v186 = vpop.trf.xlu0
    %v187 = vpop.trf.xlu0
    %v188 = vpop.trf.xlu0
    %v189 = vpop.trf.xlu0
    %v190 = vpop.trf.xlu0
    %v191 = vpop.trf.xlu0
    %v192 = vpop.trf.xlu0
    %v193 = vpop.trf.xlu0
    %v194 = vpop.trf.xlu0
    %v195 = vpop.trf.xlu0
    %v196 = vpop.trf.xlu0
    %v197 = vpop.trf.xlu0
    %v198 = vpop.trf.xlu0
    %v199 = vpop.trf.xlu0
    %v200 = vpop.trf.xlu0
    %201 = vst [vmem:[#allocation2] sm:$0xff] %v89
    %202 = vst [vmem:[#allocation2 + $0x8] sm:$0xff] %v121
    %203 = vst [vmem:[#allocation2 + $0x10] sm:$0xff] %v90
    %204 = vst [vmem:[#allocation2 + $0x18] sm:$0xff] %v122
    %205 = vst [vmem:[#allocation2 + $0x20] sm:$0xff] %v91
    %206 = vst [vmem:[#allocation2 + $0x28] sm:$0xff] %v123
    %207 = vst [vmem:[#allocation2 + $0x30] sm:$0xff] %v92
    %208 = vst [vmem:[#allocation2 + $0x38] sm:$0xff] %v124
    %209 = vst [vmem:[#allocation2 + $0x40] sm:$0xff] %v153
    %210 = vst [vmem:[#allocation2 + $0x48] sm:$0xff] %v185
    %211 = vst [vmem:[#allocation2 + $0x50] sm:$0xff] %v154
    %212 = vst [vmem:[#allocation2 + $0x58] sm:$0xff] %v186
    %213 = vst [vmem:[#allocation2 + $0x60] sm:$0xff] %v155
    %214 = vst [vmem:[#allocation2 + $0x68] sm:$0xff] %v187
    %215 = vst [vmem:[#allocation2 + $0x70] sm:$0xff] %v156
    %216 = vst [vmem:[#allocation2 + $0x78] sm:$0xff] %v188
    // Predicated region
    $region6: #{tpu_custom_call.1} parent=1 // pred_check
      _
    $region7: #{tpu_custom_call.1} parent=1 // pred_check_branch
      %218 = sbr.rel (0) target = $region9
    $region8: #{tpu_custom_call.1} parent=1 // pred_region
      %s220 = ssub.s32 2048, 2048
      %221 = vsyncadd [#allocation3], %s220
      %s222 = sshll.u32 [#allocation2], 4
      %s223 = int_to_ptr.vmem [resolvable:$true] %s222
      %228 = dma.vmem_to_hbm [thread:$0]  %s223, 2048, %s1, [#allocation3], 256, 256, 16
    $region9: #{tpu_custom_call.1} parent=1 // pred_fallthru
      _
    // Predicated region
    $region10: #{tpu_custom_call.1} parent=1 // pred_check
      _
    $region11: #{tpu_custom_call.1} parent=1 // pred_check_branch
      %230 = sbr.rel (0) target = $region13
    $region12: #{tpu_custom_call.1} parent=1 // pred_region
      %231 = dma.done [#allocation3], 2048
    $region13: #{tpu_custom_call.1} parent=1 // pred_fallthru
      _
    %232 = vsyncpa [#allocation3], 1

</llo_original>
